<compile_context>
chip_gen: v6e
topology: v6e:2x2x1
jax: 0.10.0
libtpu: 0.0.40
codegen_flags: <defaults>
</compile_context>

<pallas_src>
import math
from collections import OrderedDict
from typing import Dict, List, Optional, Tuple

import jax
import jax.numpy as jnp
from jax.experimental import pallas as pl
from jax.experimental.pallas import tpu as pltpu


# ----------------------------------------------------------------------------
# Pallas kernel: elementwise  out = lo + sigmoid(x) * scale  on [R, L] blocks,
# lo/scale provided as a (1, L) row that sublane-broadcasts over the block.
# ----------------------------------------------------------------------------
def _range_map_kernel(x_ref, lo_ref, scale_ref, o_ref):
    # Whole-block, (8,128)-dense vregs.  sigmoid via one EUP tanh per vreg.
    sig = 0.5 * jnp.tanh(0.5 * x_ref[...]) + 0.5
    o_ref[...] = lo_ref[...] + sig * scale_ref[...]      # (1,L) broadcasts over sublanes


def pallas_map_to_ranges(flat: jnp.ndarray,
                         lo_per_entry: Tuple[float, ...],
                         scale_per_entry: Tuple[float, ...],
                         *,
                         row_tile_target: int = 2048) -> jnp.ndarray:
    """Map a flat [total] f32 slab with a period-PM (lo, scale) affine sigmoid.

    flat            : lstm_out.reshape(-1) in natural contiguous order.
    lo_per_entry    : length-PM tuple; entry k applies to flat index f with f%PM == k.
    scale_per_entry : same, hi - lo.
    Returns the mapped [total] f32 array.
    """
    total = flat.shape[0]
    pm = len(lo_per_entry)
    L = 128 * pm // math.gcd(128, pm)        # lcm(PM, 128): lane-dense & period-aligned

    pad = (-total) % L
    if pad:
        # TODO(synk): rare ragged case (total not a multiple of lcm(PM,128));
        # a single pad/slice pass is unavoidable here.  Not hit at demo shapes.
        flat = jnp.pad(flat, (0, pad))
    R = (total + pad) // L
    x2d = flat.reshape(R, L)                 # free reshape of contiguous memory

    reps = L // pm
    lo_row = jnp.tile(jnp.asarray(lo_per_entry, jnp.float32), reps).reshape(1, L)
    scale_row = jnp.tile(jnp.asarray(scale_per_entry, jnp.float32), reps).reshape(1, L)

    # ~1 MiB per block (row_tile * L * 4 B); in+out double-buffered ~4 MiB,
    # safe on every generation.  >=2 tiles at large sizes -> megacore sharding.
    if R <= row_tile_target:
        row_tile = R                         # single block == full array dims
        num_tiles = 1
    else:
        row_tile = row_tile_target           # multiple of 8 sublanes
        num_tiles = pl.cdiv(R, row_tile)     # partial last tile handled by Pallas

    y2d = pl.pallas_call(
        _range_map_kernel,
        grid=(num_tiles,),
        in_specs=[pl.BlockSpec((row_tile, L), lambda r: (r, 0)),
                  pl.BlockSpec((1, L), lambda r: (0, 0)),
                  pl.BlockSpec((1, L), lambda r: (0, 0))],
        out_specs=pl.BlockSpec((row_tile, L), lambda r: (r, 0)),
        out_shape=jax.ShapeDtypeStruct((R, L), jnp.float32),
        compiler_params=pltpu.CompilerParams(dimension_semantics=("parallel",)),
    )(x2d, lo_row, scale_row)

    y = y2d.reshape(R * L)
    return y[:total] if pad else y


# ----------------------------------------------------------------------------
# JAX port of BaseConceptualModel (concrete synthetic configuration so it runs)
# ----------------------------------------------------------------------------
class BaseConceptualModelJAX:
    """HBV-like parameter ranges; 'BETA' is dynamic, the rest static."""

    def __init__(self, n_conceptual_models: int = 4,
                 dynamic_parameters: Optional[List[str]] = None):
        self.n_conceptual_models = n_conceptual_models
        self.output_size = 1
        self.parameter_type = self._map_parameter_type(dynamic_parameters)

    # --- properties mirroring the abstract interface -------------------------
    @property
    def parameter_ranges(self) -> Dict[str, List[float]]:
        return OrderedDict([
            ("BETA",  [1.0, 6.0]),
            ("FC",    [50.0, 1000.0]),
            ("K0",    [0.05, 0.9]),
            ("KPERC", [0.01, 0.25]),
        ])

    @property
    def _initial_states(self) -> Dict[str, float]:
        return OrderedDict([("SM", 0.001), ("SUZ", 0.001), ("SLZ", 0.001)])

    # --- helpers (plain JAX / Python glue, faithful to the torch code) -------
    def _map_parameter_type(self, parameter_type: Optional[List[str]] = None):
        out = {}
        for key in self.parameter_ranges:
            out[key] = "dynamic" if (parameter_type is not None and key in parameter_type) else "static"
        return out

    def _initialize_information(self, conceptual_inputs: jnp.ndarray
                                ) -> Tuple[Dict[str, jnp.ndarray], jnp.ndarray]:
        B, T = conceptual_inputs.shape[0], conceptual_inputs.shape[1]
        states = {name: jnp.zeros((B, T, self.n_conceptual_models), dtype=jnp.float32)
                  for name in self._initial_states}
        out = jnp.zeros((B, T, self.output_size), dtype=jnp.float32)
        return states, out

    def _get_final_states(self, states: Dict[str, jnp.ndarray]) -> Dict[str, jnp.ndarray]:
        return {name: state[:, -1, :] for name, state in states.items()}

    # --- map_parameters: hot path in Pallas ----------------------------------
    def map_parameters(self, lstm_out: jnp.ndarray, warmup_period: int
                       ) -> Tuple[Dict[str, jnp.ndarray], Dict[str, jnp.ndarray]]:
        B, T, n_feat = lstm_out.shape
        P = len(self.parameter_ranges)
        M = self.n_conceptual_models
        assert n_feat == P * M
        S = T - warmup_period

        # Period-(P*M) lo/scale pattern along the natural contiguous last axis.
        lo_entries: List[float] = []
        scale_entries: List[float] = []
        for rng in self.parameter_ranges.values():
            lo_entries.extend([float(rng[0])] * M)
            scale_entries.extend([float(rng[1]) - float(rng[0])] * M)

        flat = lstm_out.astype(jnp.float32).reshape(-1)           # free, contiguous
        y = pallas_map_to_ranges(flat, tuple(lo_entries), tuple(scale_entries))
        y = y.reshape(B, T, P, M)                                  # free, contiguous

        parameters_warmup: Dict[str, jnp.ndarray] = {}
        parameters_simulation: Dict[str, jnp.ndarray] = {}
        for idx, name in enumerate(self.parameter_ranges):
            ptype = self.parameter_type[name]
            if ptype == "static":
                last = y[:, -1:, idx, :]                                     # (B,1,M)
                warm = jnp.broadcast_to(last, (B, warmup_period, M))
                sim = jnp.broadcast_to(last, (B, S, M))
            elif ptype == "dynamic":
                w = y[:, warmup_period - 1:warmup_period, idx, :]            # (B,1,M)
                warm = jnp.broadcast_to(w, (B, warmup_period, M))
                sim = y[:, warmup_period:, idx, :]
            else:
                raise ValueError(f"Unsupported parameter type {ptype}")
            parameters_warmup[name] = warm
            parameters_simulation[name] = sim
        return parameters_warmup, parameters_simulation

    # TODO(synk): forward() is abstract in the torch base class (raises
    # NotImplementedError) — not implemented here either.


# ----------------------------------------------------------------------------
# Reference (pure jnp) for correctness checking
# ----------------------------------------------------------------------------
def _reference_map_parameters(model, lstm_out, warmup_period):
    B, T, _ = lstm_out.shape
    M = model.n_conceptual_models
    x = lstm_out.reshape(B, T, -1, M)
    pw, ps = {}, {}
    for idx, (name, rng) in enumerate(model.parameter_ranges.items()):
        lo, hi = float(rng[0]), float(rng[1])
        if model.parameter_type[name] == "static":
            warm = jnp.broadcast_to(x[:, -1:, idx, :], (B, warmup_period, M))
            sim = jnp.broadcast_to(x[:, -1:, idx, :], (B, T - warmup_period, M))
        else:
            warm = jnp.broadcast_to(x[:, warmup_period - 1:warmup_period, idx, :],
                                    (B, warmup_period, M))
            sim = x[:, warmup_period:, idx, :]
        pw[name] = lo + jax.nn.sigmoid(warm) * (hi - lo)
        ps[name] = lo + jax.nn.sigmoid(sim) * (hi - lo)
    return pw, ps


if __name__ == "__main__":
    # Small shapes: batch=2, time=24, n_param=4, n_conceptual_models=4
    B, T, M = 2, 24, 4
    warmup_period = 8
    model = BaseConceptualModelJAX(n_conceptual_models=M, dynamic_parameters=["BETA"])
    P = len(model.parameter_ranges)

    key = jax.random.PRNGKey(0)
    lstm_out = jax.random.normal(key, (B, T, P * M), dtype=jnp.float32)

    params_warmup, params_sim = model.map_parameters(lstm_out, warmup_period)
    jax.block_until_ready(params_warmup)
    jax.block_until_ready(params_sim)

    # correctness vs pure-JAX reference
    ref_warmup, ref_sim = _reference_map_parameters(model, lstm_out, warmup_period)
    for name in model.parameter_ranges:
        assert params_warmup[name].shape == (B, warmup_period, M)
        assert params_sim[name].shape == (B, T - warmup_period, M)
        assert jnp.allclose(params_warmup[name], ref_warmup[name], atol=2e-4, rtol=1e-4)
        assert jnp.allclose(params_sim[name], ref_sim[name], atol=2e-4, rtol=1e-4)

    # exercise the remaining base-class helpers (plain JAX glue)
    states, q_out = model._initialize_information(lstm_out)
    final_states = model._get_final_states(states)
    jax.block_until_ready(final_states)

    print("KERNEL_OK")
</pallas_src>

<mosaic_0001>
module attributes {stable_mosaic.version = 11 : i64} {
  func.func @_range_map_kernel(%arg0: i32, %arg1: memref<6x128xf32, #tpu.memory_space<vmem>>, %arg2: memref<1x128xf32, #tpu.memory_space<vmem>>, %arg3: memref<1x128xf32, #tpu.memory_space<vmem>>, %arg4: memref<6x128xf32, #tpu.memory_space<vmem>>) attributes {dimension_semantics = [#tpu.dimension_semantics<parallel>], iteration_bounds = array<i64: 1>, scalar_prefetch = 0 : i64, scratch_operands = 0 : i64, tpu.core_type = #tpu.core_type<tc>, window_params = [{transform_indices = @transform_0, window_bounds = array<i64: 6, 128>}, {pipeline_mode = #tpu.pipeline_mode<synchronous>, transform_indices = @transform_1, window_bounds = array<i64: 1, 128>}, {pipeline_mode = #tpu.pipeline_mode<synchronous>, transform_indices = @transform_2, window_bounds = array<i64: 1, 128>}, {transform_indices = @transform_3, window_bounds = array<i64: 6, 128>}]} {
    %c0 = arith.constant 0 : index
    %c0_0 = arith.constant 0 : index
    %0 = vector.load %arg1[%c0, %c0_0] : memref<6x128xf32, #tpu.memory_space<vmem>>, vector<6x128xf32>
    %cst = arith.constant 5.000000e-01 : f32
    %1 = vector.broadcast %cst : f32 to vector<6x128xf32>
    %2 = arith.mulf %1, %0 : vector<6x128xf32>
    %3 = math.tanh %2 : vector<6x128xf32>
    %cst_1 = arith.constant 5.000000e-01 : f32
    %4 = vector.broadcast %cst_1 : f32 to vector<6x128xf32>
    %5 = arith.mulf %4, %3 : vector<6x128xf32>
    %cst_2 = arith.constant 5.000000e-01 : f32
    %6 = vector.broadcast %cst_2 : f32 to vector<6x128xf32>
    %7 = arith.addf %5, %6 : vector<6x128xf32>
    %c0_3 = arith.constant 0 : index
    %c0_4 = arith.constant 0 : index
    %8 = vector.load %arg2[%c0_3, %c0_4] : memref<1x128xf32, #tpu.memory_space<vmem>>, vector<1x128xf32>
    %c0_5 = arith.constant 0 : index
    %c0_6 = arith.constant 0 : index
    %9 = vector.load %arg3[%c0_5, %c0_6] : memref<1x128xf32, #tpu.memory_space<vmem>>, vector<1x128xf32>
    %10 = vector.broadcast %9 : vector<1x128xf32> to vector<6x128xf32>
    %11 = arith.mulf %7, %10 : vector<6x128xf32>
    %12 = vector.broadcast %8 : vector<1x128xf32> to vector<6x128xf32>
    %13 = arith.addf %12, %11 : vector<6x128xf32>
    %c0_7 = arith.constant 0 : index
    %c0_8 = arith.constant 0 : index
    %14 = vector.load %arg4[%c0_7, %c0_8] : memref<6x128xf32, #tpu.memory_space<vmem>>, vector<6x128xf32>
    tpu.vector_store %arg4[%c0_7, %c0_8], %13 {strides = array<i32>} : memref<6x128xf32, #tpu.memory_space<vmem>>, vector<6x128xf32>,
    return
  }
  func.func @transform_0(%arg0: i32) -> (i32, i32) {
    %c0_i32 = arith.constant 0 : i32
    %c0_i32_0 = arith.constant 0 : i32
    return %arg0, %c0_i32 : i32, i32
  }
  func.func @transform_1(%arg0: i32) -> (i32, i32) {
    %c0_i32 = arith.constant 0 : i32
    %c0_i32_0 = arith.constant 0 : i32
    %c0_i32_1 = arith.constant 0 : i32
    return %c0_i32, %c0_i32_0 : i32, i32
  }
  func.func @transform_2(%arg0: i32) -> (i32, i32) {
    %c0_i32 = arith.constant 0 : i32
    %c0_i32_0 = arith.constant 0 : i32
    %c0_i32_1 = arith.constant 0 : i32
    return %c0_i32, %c0_i32_0 : i32, i32
  }
  func.func @transform_3(%arg0: i32) -> (i32, i32) {
    %c0_i32 = arith.constant 0 : i32
    %c0_i32_0 = arith.constant 0 : i32
    return %arg0, %c0_i32 : i32, i32
  }
}

</mosaic_0001>

<llo_original>
// kernel: tpu_custom_call.1
$region0: #{tpu_custom_call.1}
  #allocation0 [shape = 'u32[]', space=smem, size = 0x4, offset = 0x4, fixed_abs, tag = 'smem constant byte address 0x4 - core index']
  #allocation1 [shape = 'u32[144,128]{1,0:T(1,128)}', space=vmem, size = 0x12000, scoped, tag = 'internal scratch']
  %s0 = inlined_call_operand.hbm [shape: f32[6,128], index: 0, kind: input, shape index: {}]
  %s1 = inlined_call_operand.vmem [shape: f32[1,128], index: 1, kind: input, shape index: {}]
  %s2 = inlined_call_operand.vmem [shape: f32[1,128], index: 2, kind: input, shape index: {}]
  %s3 = inlined_call_operand.hbm [shape: f32[6,128], index: 3, kind: output, shape index: {}]
  %s4 = sld [smem:[#allocation0]]
  $region26: #{tpu_custom_call.1} parent=0
    _
  %s6 = ssub.s32 1, %s4
  %s7 = scalar_select 0, %s6, %s4
  $region1: #{tpu_custom_call.1} parent=0
    #allocation2 [shape = 'u8[4096]{0}', space=vmem, size = 0x1000, scoped, tag = 'input window, operand 0, single buffered']
    #allocation3 [shape = 's32[1]{0}', space=sflag, size = 0x4, scoped, tag = 'scoped memory for tpu_custom_call.1']
    #allocation4 [shape = 's32[1]{0}', space=sflag, size = 0x4, scoped, tag = 'scoped memory for tpu_custom_call.1']
    #allocation5 [shape = 'u8[4096]{0}', space=vmem, size = 0x1000, scoped, tag = 'output window, operand 0, single buffered']
    %8 = vsyncpa [#allocation3], 0
    %9 = vsyncpa [#allocation4], 0
    // Predicated region
    $region2: #{tpu_custom_call.1} parent=1 // pred_check
      _
    $region3: #{tpu_custom_call.1} parent=1 // pred_check_branch
      %11 = sbr.rel (0) target = $region5
    $region4: #{tpu_custom_call.1} parent=1 // pred_region
      %s13 = ssub.s32 128, 128
      %14 = vsyncadd [#allocation3], %s13
      %s16 = sshll.u32 [#allocation2], 4
      %s17 = int_to_ptr.vmem [resolvable:$true] %s16
      %19 = dma.hbm_to_vmem [thread:$0]  %s0, 128, %s17, [#allocation3]
    $region5: #{tpu_custom_call.1} parent=1 // pred_fallthru
      _
    // Predicated region
    $region6: #{tpu_custom_call.1} parent=1 // pred_check
      _
    $region7: #{tpu_custom_call.1} parent=1 // pred_check_branch
      %21 = sbr.rel (0) target = $region9
    $region8: #{tpu_custom_call.1} parent=1 // pred_region
      _
    $region9: #{tpu_custom_call.1} parent=1 // pred_fallthru
      _
    // Predicated region
    $region10: #{tpu_custom_call.1} parent=1 // pred_check
      _
    $region11: #{tpu_custom_call.1} parent=1 // pred_check_branch
      %23 = sbr.rel (0) target = $region13
    $region12: #{tpu_custom_call.1} parent=1 // pred_region
      _
    $region13: #{tpu_custom_call.1} parent=1 // pred_fallthru
      _
    // Predicated region
    $region14: #{tpu_custom_call.1} parent=1 // pred_check
      _
    $region15: #{tpu_custom_call.1} parent=1 // pred_check_branch
      %25 = sbr.rel (0) target = $region17
    $region16: #{tpu_custom_call.1} parent=1 // pred_region
      %26 = dma.done [#allocation3], 128
    $region17: #{tpu_custom_call.1} parent=1 // pred_fallthru
      _
    %v27 = vld [vmem:[#allocation2] sm:$0x3f]
    %v28 = vmul.f32 %v27, 0.5
    %v29 = vtanh.pop %v28
    %v30 = vmul.f32 %v29, 0.5
    %v31 = vadd.f32 %v30, 0.5
    %v32 = vld [vmem:[%s1] sm:$0x1]
    %v33 = vld [vmem:[%s2] sm:$0x1]
    %v35 = vlaneseq
    %v36 = vshrl.u32 %v35, 7
    %v37 = vsub.s32 0, %v36
    %v38 = vrot.slane %v33, %v37
    %v40 = vmul.f32 %v31, %v38
    %v42 = vlaneseq
    %v43 = vshrl.u32 %v42, 7
    %v44 = vsub.s32 0, %v43
    %v45 = vrot.slane %v32, %v44
    %v47 = vadd.f32 %v45, %v40
    %48 = vst [vmem:[#allocation5] sm:$0x3f] %v47
    // Predicated region
    $region18: #{tpu_custom_call.1} parent=1 // pred_check
      _
    $region19: #{tpu_custom_call.1} parent=1 // pred_check_branch
      %50 = sbr.rel (0) target = $region21
    $region20: #{tpu_custom_call.1} parent=1 // pred_region
      %s52 = ssub.s32 128, 128
      %53 = vsyncadd [#allocation4], %s52
      %s55 = sshll.u32 [#allocation5], 4
      %s56 = int_to_ptr.vmem [resolvable:$true] %s55
      %58 = dma.vmem_to_hbm [thread:$0]  %s56, 128, %s3, [#allocation4]
    $region21: #{tpu_custom_call.1} parent=1 // pred_fallthru
      _
    // Predicated region
    $region22: #{tpu_custom_call.1} parent=1 // pred_check
      _
    $region23: #{tpu_custom_call.1} parent=1 // pred_check_branch
      %60 = sbr.rel (0) target = $region25
    $region24: #{tpu_custom_call.1} parent=1 // pred_region
      %61 = dma.done [#allocation4], 128
    $region25: #{tpu_custom_call.1} parent=1 // pred_fallthru
      _
    %62 = vsyncpa [#allocation3], 1
    %63 = vsyncpa [#allocation4], 1

</llo_original>
